<compile_context>
chip_gen: v5e
topology: v5e:2x2
jax: 0.10.0
libtpu: 0.0.40
codegen_flags: <defaults>
</compile_context>

<pallas_src>
import jax
import jax.numpy as jnp
from jax import lax
from jax.experimental import pallas as pl
from jax.experimental.pallas import tpu as pltpu


def _round_up(a, b):
    return (a + b - 1) // b * b


def _vmem_budget_bytes():
    """~80% of this generation's VMEM, capped at 100 MiB (v5e/v6e), floored at 16 MiB."""
    try:
        cap = int(pltpu.get_tpu_info().vmem_capacity_bytes)
    except Exception:
        cap = 64 << 20  # conservative (v7x per-TC)
    return max(min(int(cap * 0.8), 100 << 20), 16 << 20)


def _num_tensorcores():
    """Best-effort TensorCore count per device; defaults to 1 if unknown."""
    try:
        info = pltpu.get_tpu_info()
        for attr in ("num_cores", "core_count", "tensorcore_count", "num_tensorcores"):
            v = getattr(info, attr, None)
            if isinstance(v, int) and v > 0:
                return v
    except Exception:
        pass
    try:
        v = getattr(jax.devices()[0], "num_cores", None)
        if isinstance(v, int) and v > 0:
            return v
    except Exception:
        pass
    return 1


def _make_kernel(n_chunks):
    """FFN kernel over one (row-tile, d_ff-chunk) grid point.

    Weights are consumed in torch layout: w1_ref is a (tk, d_model) chunk of
    w1 (d_ff, d_model); w2_ref is a (d_model, tk) chunk of w2 (d_model, d_ff).
    Both matmuls contract the last dim of LHS against the last dim of RHS
    (A @ B^T form), so no host-side transpose is needed.
    """
    contract_last = (((1,), (1,)), ((), ()))

    def _ffn_body(x_ref, w1_ref, b1_ref):
        x = x_ref[...]
        h = lax.dot_general(x, w1_ref[...], contract_last,
                            preferred_element_type=jnp.float32)
        h = jnp.maximum(h + b1_ref[...].astype(jnp.float32), 0.0)
        # Dropout: inference mode -> identity.
        if x.dtype != jnp.float32:
            h = h.astype(x.dtype)  # bf16/low-precision MXU path; acc stays f32.
        return h

    if n_chunks == 1:
        def kernel(x_ref, w1_ref, b1_ref, w2_ref, b2_ref, o_ref):
            h = _ffn_body(x_ref, w1_ref, b1_ref)
            y = lax.dot_general(h, w2_ref[...], contract_last,
                                preferred_element_type=jnp.float32)
            o_ref[...] = (y + b2_ref[...].astype(jnp.float32)).astype(o_ref.dtype)
        return kernel

    def kernel(x_ref, w1_ref, b1_ref, w2_ref, b2_ref, o_ref, acc_ref):
        k = pl.program_id(1)
        h = _ffn_body(x_ref, w1_ref, b1_ref)
        part = lax.dot_general(h, w2_ref[...], contract_last,
                               preferred_element_type=jnp.float32)

        @pl.when(k == 0)
        def _():
            acc_ref[...] = part          # direct write: no zero-init pass

        @pl.when(k > 0)
        def _():
            acc_ref[...] += part

        @pl.when(k == n_chunks - 1)
        def _():
            o_ref[...] = (acc_ref[...] + b2_ref[...].astype(jnp.float32)).astype(
                o_ref.dtype)

    return kernel


def positionwise_feed_forward(x, w1, b1, w2, b2, *, tm=512, tk=512):
    """x: (batch, seq, d_model).
    Torch nn.Linear parameter layout: w1: (d_ff, d_model), b1: (d_ff,),
    w2: (d_model, d_ff), b2: (d_model,).  Weights are consumed as-is."""
    batch, seq, d_model = x.shape
    d_ff = w1.shape[0]
    assert w1.shape == (d_ff, d_model)
    assert w2.shape == (d_model, d_ff)

    M = batch * seq
    itemsize = jnp.dtype(x.dtype).itemsize
    sublane = 8 * max(1, 4 // itemsize)          # 8 for f32, 16 for bf16, ...
    num_cores = _num_tensorcores()
    vmem_budget = _vmem_budget_bytes()

    # ---- tile selection -------------------------------------------------
    def pick_tm(tm_target):
        if M <= tm_target:
            # Whole M in one tile.  If >=2 TensorCores, split so the
            # "parallel" row axis has work for both cores.
            if num_cores >= 2 and M >= 2 * sublane:
                tm_e = _round_up((M + 1) // 2, sublane)
                return tm_e, _round_up(M, tm_e)
            return M, M                          # full-dim block, no pad
        tm_e = _round_up(tm_target, sublane)
        return tm_e, _round_up(M, tm_e)

    def pick_tk(tk_target):
        if d_ff <= tk_target:
            return d_ff, d_ff                    # single chunk, no pad
        # Largest multiple of 128 <= tk_target that divides d_ff (no pad).
        cand = (tk_target // 128) * 128
        while cand >= 128:
            if d_ff % cand == 0:
                return cand, d_ff
            cand -= 128
        # Fallback: pad d_ff (padding is inert: relu(0+0)=0, zero W2 cols).
        tk_e = _round_up(min(tk_target, d_ff), 128)
        return tk_e, _round_up(d_ff, tk_e)

    def vmem_need(tm_e, tk_e, with_acc):
        need = 2 * itemsize * (
            tm_e * d_model           # x tile (double buffered)
            + tk_e * d_model         # w1 chunk
            + tk_e                   # b1 chunk
            + tk_e * d_model         # w2 chunk
            + d_model                # b2
            + tm_e * d_model)        # out tile
        if with_acc:
            need += 4 * tm_e * d_model   # f32 accumulator scratch
        return need

    tm_t, tk_t = tm, tk
    while True:
        tm_eff, M_pad = pick_tm(tm_t)
        tk_eff, dff_pad = pick_tk(tk_t)
        n_chunks = dff_pad // tk_eff
        if vmem_need(tm_eff, tk_eff, n_chunks > 1) <= vmem_budget:
            break
        if tk_t > 128:                 # shrink reduction chunk first (v7x advice)
            tk_t //= 2
        elif tm_t > 128:
            tm_t //= 2
        else:
            break                      # smallest config; let the compiler try

    # ---- host-side prep (no weight transpose; pad only when unavoidable) --
    x2d = x.reshape(M, d_model)
    if M_pad != M:
        x2d = jnp.pad(x2d, ((0, M_pad - M), (0, 0)))

    w1_in = w1                                   # (d_ff, d_model) torch layout
    w2_in = w2                                   # (d_model, d_ff) torch layout
    b1_2d = b1.reshape(1, d_ff)
    if dff_pad != d_ff:                          # rare fallback only
        w1_in = jnp.pad(w1_in, ((0, dff_pad - d_ff), (0, 0)))
        w2_in = jnp.pad(w2_in, ((0, 0), (0, dff_pad - d_ff)))
        b1_2d = jnp.pad(b1_2d, ((0, 0), (0, dff_pad - d_ff)))
    b2_2d = b2.reshape(1, d_model)

    row_tiles = M_pad // tm_eff
    grid = (row_tiles, n_chunks)

    vmem_limit = min(int(vmem_need(tm_eff, tk_eff, n_chunks > 1) * 1.5) + (2 << 20),
                     vmem_budget)

    cost = pl.CostEstimate(
        flops=4 * M_pad * d_model * dff_pad,     # two matmuls, 2 flops/MAC each
        transcendentals=0,
        bytes_accessed=itemsize * (
            2 * M_pad * d_model                  # x in, y out
            + row_tiles * 2 * d_model * dff_pad  # weights re-streamed per row tile
            + dff_pad + d_model),                # biases
    )

    scratch = [] if n_chunks == 1 else [pltpu.VMEM((tm_eff, d_model), jnp.float32)]

    out2d = pl.pallas_call(
        _make_kernel(n_chunks),
        out_shape=jax.ShapeDtypeStruct((M_pad, d_model), x.dtype),
        grid_spec=pltpu.PrefetchScalarGridSpec(
            num_scalar_prefetch=0,
            grid=grid,
            in_specs=[
                pl.BlockSpec((tm_eff, d_model), lambda i, k: (i, 0)),   # x
                pl.BlockSpec((tk_eff, d_model), lambda i, k: (k, 0)),   # w1 chunk
                pl.BlockSpec((1, tk_eff), lambda i, k: (0, k)),         # b1 chunk
                pl.BlockSpec((d_model, tk_eff), lambda i, k: (0, k)),   # w2 chunk
                pl.BlockSpec((1, d_model), lambda i, k: (0, 0)),        # b2
            ],
            out_specs=pl.BlockSpec((tm_eff, d_model), lambda i, k: (i, 0)),
            scratch_shapes=scratch,
        ),
        compiler_params=pltpu.CompilerParams(
            dimension_semantics=("parallel", "arbitrary"),
            vmem_limit_bytes=vmem_limit,
        ),
        cost_estimate=cost,
    )(x2d, w1_in, b1_2d, w2_in, b2_2d)

    if M_pad != M:
        out2d = out2d[:M]
    return out2d.reshape(batch, seq, d_model)


def _ref_ffn(x, w1, b1, w2, b2):
    return jnp.maximum(x @ w1.T + b1, 0.0) @ w2.T + b2


if __name__ == "__main__":
    key = jax.random.PRNGKey(0)

    # --- Small shapes consistent with the module's forward. ---
    batch, seq, d_model, d_ff = 2, 8, 32, 64
    kx, kw1, kb1, kw2, kb2, k2 = jax.random.split(key, 6)

    x = jax.random.normal(kx, (batch, seq, d_model), dtype=jnp.float32)
    # Torch nn.Linear parameter shapes: weight (out, in), bias (out,).
    w1 = jax.random.normal(kw1, (d_ff, d_model), dtype=jnp.float32) * 0.1
    b1 = jax.random.normal(kb1, (d_ff,), dtype=jnp.float32) * 0.1
    w2 = jax.random.normal(kw2, (d_model, d_ff), dtype=jnp.float32) * 0.1
    b2 = jax.random.normal(kb2, (d_model,), dtype=jnp.float32) * 0.1

    out = jax.block_until_ready(positionwise_feed_forward(x, w1, b1, w2, b2))
    ref = _ref_ffn(x, w1, b1, w2, b2)
    assert out.shape == (batch, seq, d_model)
    assert jnp.allclose(out, ref, atol=1e-5, rtol=1e-5)

    # --- Second check exercising the tiled d_ff reduction path (n_chunks > 1). ---
    b2_, s2_, dm2_, dff2_ = 2, 128, 128, 1024
    ka, kb, kc, kd, ke = jax.random.split(k2, 5)
    x2 = jax.random.normal(ka, (b2_, s2_, dm2_), dtype=jnp.float32)
    w1b = jax.random.normal(kb, (dff2_, dm2_), dtype=jnp.float32) * 0.05
    b1b = jax.random.normal(kc, (dff2_,), dtype=jnp.float32) * 0.05
    w2b = jax.random.normal(kd, (dm2_, dff2_), dtype=jnp.float32) * 0.05
    b2b = jax.random.normal(ke, (dm2_,), dtype=jnp.float32) * 0.05

    out2 = jax.block_until_ready(
        positionwise_feed_forward(x2, w1b, b1b, w2b, b2b, tm=512, tk=512))
    ref2 = _ref_ffn(x2, w1b, b1b, w2b, b2b)
    assert out2.shape == (b2_, s2_, dm2_)
    assert jnp.allclose(out2, ref2, atol=1e-3, rtol=1e-3)

    print("KERNEL_OK")
</pallas_src>

<mosaic_0001>
module attributes {stable_mosaic.version = 11 : i64} {
  func.func @kernel(%arg0: i32, %arg1: i32, %arg2: memref<16x32xf32, #tpu.memory_space<vmem>>, %arg3: memref<64x32xf32, #tpu.memory_space<vmem>>, %arg4: memref<1x64xf32, #tpu.memory_space<vmem>>, %arg5: memref<32x64xf32, #tpu.memory_space<vmem>>, %arg6: memref<1x32xf32, #tpu.memory_space<vmem>>, %arg7: memref<16x32xf32, #tpu.memory_space<vmem>>) attributes {dimension_semantics = [#tpu.dimension_semantics<parallel>, #tpu.dimension_semantics<arbitrary>], iteration_bounds = array<i64: 1, 1>, scalar_prefetch = 0 : i64, scratch_operands = 0 : i64, tpu.core_type = #tpu.core_type<tc>, window_params = [{transform_indices = @transform_0, window_bounds = array<i64: 16, 32>}, {transform_indices = @transform_1, window_bounds = array<i64: 64, 32>}, {transform_indices = @transform_2, window_bounds = array<i64: 1, 64>}, {transform_indices = @transform_3, window_bounds = array<i64: 32, 64>}, {pipeline_mode = #tpu.pipeline_mode<synchronous>, transform_indices = @transform_4, window_bounds = array<i64: 1, 32>}, {transform_indices = @transform_5, window_bounds = array<i64: 16, 32>}]} {
    %c0 = arith.constant 0 : index
    %c0_0 = arith.constant 0 : index
    %0 = vector.load %arg2[%c0, %c0_0] : memref<16x32xf32, #tpu.memory_space<vmem>>, vector<16x32xf32>
    %c0_1 = arith.constant 0 : index
    %c0_2 = arith.constant 0 : index
    %1 = vector.load %arg3[%c0_1, %c0_2] : memref<64x32xf32, #tpu.memory_space<vmem>>, vector<64x32xf32>
    %cst = arith.constant dense<0.000000e+00> : vector<16x64xf32>
    %2 = tpu.matmul %0, %1, %cst {dimension_numbers = #tpu.dot_dimension_numbers<[1], [1], [0], [0], [0, 0, 1, 0], [], []>} : vector<16x32xf32>, vector<64x32xf32>, vector<16x64xf32> -> vector<16x64xf32>
    %c0_3 = arith.constant 0 : index
    %c0_4 = arith.constant 0 : index
    %3 = vector.load %arg4[%c0_3, %c0_4] : memref<1x64xf32, #tpu.memory_space<vmem>>, vector<1x64xf32>
    %4 = vector.broadcast %3 : vector<1x64xf32> to vector<16x64xf32>
    %5 = arith.addf %2, %4 : vector<16x64xf32>
    %cst_5 = arith.constant 0.000000e+00 : f32
    %6 = vector.broadcast %cst_5 : f32 to vector<16x64xf32>
    %7 = arith.maximumf %5, %6 : vector<16x64xf32>
    %c0_6 = arith.constant 0 : index
    %c0_7 = arith.constant 0 : index
    %8 = vector.load %arg5[%c0_6, %c0_7] : memref<32x64xf32, #tpu.memory_space<vmem>>, vector<32x64xf32>
    %cst_8 = arith.constant dense<0.000000e+00> : vector<16x32xf32>
    %9 = tpu.matmul %7, %8, %cst_8 {dimension_numbers = #tpu.dot_dimension_numbers<[1], [1], [0], [0], [0, 0, 1, 0], [], []>} : vector<16x64xf32>, vector<32x64xf32>, vector<16x32xf32> -> vector<16x32xf32>
    %c0_9 = arith.constant 0 : index
    %c0_10 = arith.constant 0 : index
    %10 = vector.load %arg6[%c0_9, %c0_10] : memref<1x32xf32, #tpu.memory_space<vmem>>, vector<1x32xf32>
    %11 = vector.broadcast %10 : vector<1x32xf32> to vector<16x32xf32>
    %12 = arith.addf %9, %11 : vector<16x32xf32>
    %c0_11 = arith.constant 0 : index
    %c0_12 = arith.constant 0 : index
    %13 = vector.load %arg7[%c0_11, %c0_12] : memref<16x32xf32, #tpu.memory_space<vmem>>, vector<16x32xf32>
    tpu.vector_store %arg7[%c0_11, %c0_12], %12 {strides = array<i32>} : memref<16x32xf32, #tpu.memory_space<vmem>>, vector<16x32xf32>,
    return
  }
  func.func @transform_0(%arg0: i32, %arg1: i32) -> (i32, i32) {
    %c0_i32 = arith.constant 0 : i32
    %c0_i32_0 = arith.constant 0 : i32
    return %arg0, %c0_i32 : i32, i32
  }
  func.func @transform_1(%arg0: i32, %arg1: i32) -> (i32, i32) {
    %c0_i32 = arith.constant 0 : i32
    %c0_i32_0 = arith.constant 0 : i32
    return %arg1, %c0_i32 : i32, i32
  }
  func.func @transform_2(%arg0: i32, %arg1: i32) -> (i32, i32) {
    %c0_i32 = arith.constant 0 : i32
    %c0_i32_0 = arith.constant 0 : i32
    return %c0_i32, %arg1 : i32, i32
  }
  func.func @transform_3(%arg0: i32, %arg1: i32) -> (i32, i32) {
    %c0_i32 = arith.constant 0 : i32
    %c0_i32_0 = arith.constant 0 : i32
    return %c0_i32, %arg1 : i32, i32
  }
  func.func @transform_4(%arg0: i32, %arg1: i32) -> (i32, i32) {
    %c0_i32 = arith.constant 0 : i32
    %c0_i32_0 = arith.constant 0 : i32
    %c0_i32_1 = arith.constant 0 : i32
    return %c0_i32, %c0_i32_0 : i32, i32
  }
  func.func @transform_5(%arg0: i32, %arg1: i32) -> (i32, i32) {
    %c0_i32 = arith.constant 0 : i32
    %c0_i32_0 = arith.constant 0 : i32
    return %arg0, %c0_i32 : i32, i32
  }
}

</mosaic_0001>

<llo_original>
// kernel: tpu_custom_call.1
$region0: #{tpu_custom_call.1}
  #allocation0 [shape = 'u32[]', space=smem, size = 0x4, offset = 0x4, fixed_abs, tag = 'smem constant byte address 0x4 - core index']
  #allocation1 [shape = 'u32[72,128]{1,0:T(1,128)}', space=vmem, size = 0x9000, scoped, tag = 'internal scratch']
  %s0 = inlined_call_operand.vmem [shape: f32[16,32], index: 0, kind: input, shape index: {}]
  %s1 = inlined_call_operand.vmem [shape: f32[64,32], index: 1, kind: input, shape index: {}]
  %s2 = inlined_call_operand.vmem [shape: f32[1,64], index: 2, kind: input, shape index: {}]
  %s3 = inlined_call_operand.vmem [shape: f32[32,64], index: 3, kind: input, shape index: {}]
  %s4 = inlined_call_operand.vmem [shape: f32[1,32], index: 4, kind: input, shape index: {}]
  %s5 = inlined_call_operand.hbm [shape: f32[16,32], index: 5, kind: output, shape index: {}]
  %s6 = sld [smem:[#allocation0]]
  $region30: #{tpu_custom_call.1} parent=0
    _
  %s8 = ssub.s32 1, %s6
  %s9 = scalar_select 0, %s8, %s6
  $region1: #{tpu_custom_call.1} parent=0
    #allocation2 [shape = 'u8[8192]{0}', space=vmem, size = 0x2000, scoped, tag = 'output window, operand 0, single buffered']
    #allocation3 [shape = 's32[1]{0}', space=sflag, size = 0x4, scoped, tag = 'scoped memory for tpu_custom_call.1']
    %10 = vsyncpa [#allocation3], 0
    // Predicated region
    $region2: #{tpu_custom_call.1} parent=1 // pred_check
      _
    $region3: #{tpu_custom_call.1} parent=1 // pred_check_branch
      %12 = sbr.rel (0) target = $region5
    $region4: #{tpu_custom_call.1} parent=1 // pred_region
      _
    $region5: #{tpu_custom_call.1} parent=1 // pred_fallthru
      _
    // Predicated region
    $region6: #{tpu_custom_call.1} parent=1 // pred_check
      _
    $region7: #{tpu_custom_call.1} parent=1 // pred_check_branch
      %14 = sbr.rel (0) target = $region9
    $region8: #{tpu_custom_call.1} parent=1 // pred_region
      _
    $region9: #{tpu_custom_call.1} parent=1 // pred_fallthru
      _
    // Predicated region
    $region10: #{tpu_custom_call.1} parent=1 // pred_check
      _
    $region11: #{tpu_custom_call.1} parent=1 // pred_check_branch
      %16 = sbr.rel (0) target = $region13
    $region12: #{tpu_custom_call.1} parent=1 // pred_region
      _
    $region13: #{tpu_custom_call.1} parent=1 // pred_fallthru
      _
    // Predicated region
    $region14: #{tpu_custom_call.1} parent=1 // pred_check
      _
    $region15: #{tpu_custom_call.1} parent=1 // pred_check_branch
      %18 = sbr.rel (0) target = $region17
    $region16: #{tpu_custom_call.1} parent=1 // pred_region
      _
    $region17: #{tpu_custom_call.1} parent=1 // pred_fallthru
      _
    // Predicated region
    $region18: #{tpu_custom_call.1} parent=1 // pred_check
      _
    $region19: #{tpu_custom_call.1} parent=1 // pred_check_branch
      %20 = sbr.rel (0) target = $region21
    $region20: #{tpu_custom_call.1} parent=1 // pred_region
      _
    $region21: #{tpu_custom_call.1} parent=1 // pred_fallthru
      _
    %v21 = vld [vmem:[%s0] sm:$0xff]
    %v22 = vld [vmem:[%s0 + $0x8] sm:$0xff]
    %v23 = vld [vmem:[%s1] sm:$0xff]
    %v24 = vld [vmem:[%s1 + $0x8] sm:$0xff]
    %v25 = vld [vmem:[%s1 + $0x10] sm:$0xff]
    %v26 = vld [vmem:[%s1 + $0x18] sm:$0xff]
    %v27 = vld [vmem:[%s1 + $0x20] sm:$0xff]
    %v28 = vld [vmem:[%s1 + $0x28] sm:$0xff]
    %v29 = vld [vmem:[%s1 + $0x30] sm:$0xff]
    %v30 = vld [vmem:[%s1 + $0x38] sm:$0xff]
    %v31 = vld [vmem:[%s2] sm:$0x1]
    %v33 = vperm.slane %v31, 0
    %vm35 = vcmask 261120
    %v37 = vsel %vm35, %v21, 0
    %v40 = vsel %vm35, %v22, 0
    %v43 = vsel %vm35, %v23, 0
    %v46 = vsel %vm35, %v24, 0
    %v49 = vsel %vm35, %v25, 0
    %v52 = vsel %vm35, %v26, 0
    %v55 = vsel %vm35, %v27, 0
    %v58 = vsel %vm35, %v28, 0
    %v61 = vsel %vm35, %v29, 0
    %v64 = vsel %vm35, %v30, 0
    %66 = vmatpush.xpose.msra.mxu0 0.0
    %67 = vmatpush.xpose.msra.mxu0 0.0
    %68 = vmatpush.xpose.msra.mxu0 0.0
    %69 = vmatpush.xpose.msra.mxu0 0.0
    %70 = vmatpush.xpose.msra.mxu0 0.0
    %71 = vmatpush.xpose.msra.mxu0 0.0
    %72 = vmatpush.xpose.msra.mxu0 0.0
    %73 = vmatpush.xpose.msra.mxu0 0.0
    %74 = vmatpush.xpose.msra.mxu0 %v64
    %75 = vmatpush.xpose.msra.mxu0 %v61
    %76 = vmatpush.xpose.msra.mxu0 %v58
    %77 = vmatpush.xpose.msra.mxu0 %v55
    %78 = vmatpush.xpose.msra.mxu0 %v52
    %79 = vmatpush.xpose.msra.mxu0 %v49
    %80 = vmatpush.xpose.msra.mxu0 %v46
    %81 = vmatpush.xpose.msra.mxu0 %v43
    %82 = vmatmul.f32.gmra.mxu0 %v37
    %v83 = vpop.f32.mrf.mxu0
    %v84 = vadd.f32 %v33, %v83
    %85 = vmatmul.f32.gmra.mxu0 %v40
    %v86 = vpop.f32.mrf.mxu0
    %v87 = vadd.f32 %v33, %v86
    %88 = vdwg.mxu0
    %v89 = vmax.f32 %v84, 0.0
    %v90 = vmax.f32 %v87, 0.0
    %v91 = vld [vmem:[%s3] sm:$0xff]
    %v92 = vld [vmem:[%s3 + $0x8] sm:$0xff]
    %v93 = vld [vmem:[%s3 + $0x10] sm:$0xff]
    %v94 = vld [vmem:[%s3 + $0x18] sm:$0xff]
    %v95 = vld [vmem:[%s4] sm:$0x1]
    %v97 = vperm.slane %v95, 0
    %vm99 = vcmask 523264
    %v101 = vsel %vm99, %v89, 0
    %v104 = vsel %vm99, %v90, 0
    %v107 = vsel %vm99, %v91, 0
    %v110 = vsel %vm99, %v92, 0
    %v113 = vsel %vm99, %v93, 0
    %v116 = vsel %vm99, %v94, 0
    %118 = vmatpush.xpose.msra.mxu0 0.0
    %119 = vmatpush.xpose.msra.mxu0 0.0
    %120 = vmatpush.xpose.msra.mxu0 0.0
    %121 = vmatpush.xpose.msra.mxu0 0.0
    %122 = vmatpush.xpose.msra.mxu0 0.0
    %123 = vmatpush.xpose.msra.mxu0 0.0
    %124 = vmatpush.xpose.msra.mxu0 0.0
    %125 = vmatpush.xpose.msra.mxu0 0.0
    %126 = vmatpush.xpose.msra.mxu0 0.0
    %127 = vmatpush.xpose.msra.mxu0 0.0
    %128 = vmatpush.xpose.msra.mxu0 0.0
    %129 = vmatpush.xpose.msra.mxu0 0.0
    %130 = vmatpush.xpose.msra.mxu0 %v116
    %131 = vmatpush.xpose.msra.mxu0 %v113
    %132 = vmatpush.xpose.msra.mxu0 %v110
    %133 = vmatpush.xpose.msra.mxu0 %v107
    %134 = vmatmul.f32.gmra.mxu0 %v101
    %v135 = vpop.f32.mrf.mxu0
    %v136 = vadd.f32 %v97, %v135
    %137 = vmatmul.f32.gmra.mxu0 %v104
    %v138 = vpop.f32.mrf.mxu0
    %v139 = vadd.f32 %v97, %v138
    %140 = vdwg.mxu0
    %141 = vst.msk [vmem:[#allocation2] sm:$0xff] %vm35, %v136
    %142 = vst.msk [vmem:[#allocation2 + $0x8] sm:$0xff] %vm35, %v139
    // Predicated region
    $region22: #{tpu_custom_call.1} parent=1 // pred_check
      _
    $region23: #{tpu_custom_call.1} parent=1 // pred_check_branch
      %144 = sbr.rel (0) target = $region25
    $region24: #{tpu_custom_call.1} parent=1 // pred_region
      %146 = vsyncadd [#allocation3], 0
      %s147 = sshll.u32 [#allocation2], 4
      %s148 = int_to_ptr.vmem [resolvable:$true] %s147
      %s149 = sshll.u32 %s5, 4
      %s150 = int_to_ptr.hbm [resolvable:$true] %s149
      %155 = dma.vmem_to_hbm [thread:$0]  %s148, 256, %s150, [#allocation3], 128, 128, 8
    $region25: #{tpu_custom_call.1} parent=1 // pred_fallthru
      _
    // Predicated region
    $region26: #{tpu_custom_call.1} parent=1 // pred_check
      _
    $region27: #{tpu_custom_call.1} parent=1 // pred_check_branch
      %157 = sbr.rel (0) target = $region29
    $region28: #{tpu_custom_call.1} parent=1 // pred_region
      %159 = dma.done [#allocation3], 256
    $region29: #{tpu_custom_call.1} parent=1 // pred_fallthru
      _
    %160 = vsyncpa [#allocation3], 1

</llo_original>
